<compile_context>
chip_gen: v7x
topology: tpu7x:2x2x1
jax: 0.10.0
libtpu: 0.0.40
codegen_flags: <defaults>
</compile_context>

<pallas_src>
import functools

import jax
import jax.numpy as jnp
from jax import lax
from jax.experimental import pallas as pl
from jax.experimental.pallas import tpu as pltpu


def _residual_kernel(x_ref, w_ref, bn_ref, out_ref, *, H, W, C, B):
    """One grid step processes B images packed on the sublane axis.

    x_ref  : (B*C, H*W)        f32  input slab (row = b*C + cin, lane = h*W + w)
    w_ref  : (2, B*C, 9*B*C)   f32  block-diagonal conv weights (conv1, conv2)
    bn_ref : (B*C, 4)          f32  columns = [scale1, bias1, scale2, bias2]
                                    (fused eval-mode BN: s = g/sqrt(v+eps), b' = b - m*s)
    out_ref: (B*C, H*W)        f32
    """
    HW = H * W
    BC = B * C

    # Per-lane (row, col) coordinates of the folded spatial axis.
    pos = lax.broadcasted_iota(jnp.int32, (1, HW), 1)
    if W & (W - 1) == 0:                      # power-of-two fast path
        col = pos & (W - 1)
        row = pos >> (W.bit_length() - 1)
    else:
        col = pos % W
        row = pos // W

    # Hoisted once: the nine border masks + lane shifts. The masks implement
    # the conv's zero padding (out-of-image lanes are select-killed); they are
    # shared by both convs and all B images. INVARIANT: every non-center tap
    # below must be masked with masks[k] — the roll wraps around the image.
    shifts = []
    masks = []
    for dy in range(3):
        for dx in range(3):
            shifts.append((dy - 1) * W + (dx - 1))
            r = row + (dy - 1)
            c = col + (dx - 1)
            masks.append((r >= 0) & (r < H) & (c >= 0) & (c < W))

    w1 = w_ref[0]                             # (BC, 9*BC)
    w2 = w_ref[1]
    s1 = bn_ref[:, 0:1]
    b1 = bn_ref[:, 1:2]
    s2 = bn_ref[:, 2:3]
    b2 = bn_ref[:, 3:4]

    def conv3x3(w, x):
        # im2col via XLU rotations of register-resident data; single MXU
        # contraction with K = 9*B*C for all images at once (f32 accumulate).
        taps = []
        for k in range(9):
            s = shifts[k]
            if s == 0:
                taps.append(x)                # center tap: always in-image
            else:
                # tap[p] = x[p + s]  ==  jnp.roll(x, -s)  (roll matches jnp.roll)
                t = pltpu.roll(x, (-s) % HW, 1)
                taps.append(jnp.where(masks[k], t, 0.0))
        patch = jnp.concatenate(taps, axis=0)             # (9*BC, HW)
        return jnp.dot(w, patch, preferred_element_type=jnp.float32)  # (BC, HW)

    x = x_ref[...]                                        # (BC, HW) f32

    # conv1 -> BN1 -> ReLU
    h = conv3x3(w1, x)
    h = jnp.maximum(h * s1 + b1, 0.0)

    # conv2 -> BN2 -> residual add -> ReLU
    y = conv3x3(w2, h)
    y = y * s2 + b2 + x
    out_ref[...] = jnp.maximum(y, 0.0).astype(out_ref.dtype)   # lane-dense, full-sublane store


def _num_tensorcores() -> int:
    """Best-effort TensorCore count of the local chip (1 on v5e/v6e, 2 on v7x)."""
    try:
        return max(1, int(getattr(jax.devices()[0], "num_cores", 1)))
    except Exception:
        return 1


def _images_per_block(n: int, c: int, num_cores: int = 1, max_images: int = 8) -> int:
    """Images per grid step.

    Priority 1: fill the 8-sublane vreg axis (B*C multiple of 8) — the kernel is
    VPU/overhead bound, so half-empty vregs cost ~2x.  Priority 2: on multi-TC
    chips (v7x) prefer a step count that divides evenly across cores.  On 1-TC
    chips (v5e/v6e) simply maximize B to amortize per-step pipeline overhead.
    """
    divisors = [b for b in range(1, min(max_images, n) + 1) if n % b == 0]
    full = [b for b in divisors if (b * c) % 8 == 0] or divisors
    if num_cores > 1:
        even = [b for b in full if (n // b) % num_cores == 0] or full
        return max(even)
    return max(full)


def _vmem_limit_bytes() -> int:
    """Chip-aware scoped-VMEM limit (footprint here is <1 MiB; cap generously)."""
    try:
        cap = int(pltpu.get_tpu_info().vmem_capacity_bytes)
    except Exception:
        cap = 64 * 1024 * 1024            # conservative (v7x physical VMEM)
    return min(cap // 2, 32 * 1024 * 1024)


def residual_layer(x_nchw, w1_oihw, w2_oihw, bn1, bn2, *, eps=1e-5,
                   images_per_block=None):
    """Pallas implementation of ResidualLayer(deep=False).forward (eval-mode BN).

    x_nchw : (N, C, H, W) float32
    w*_oihw: (C, C, 3, 3) float32   (PyTorch conv weight layout)
    bn*    : tuple (gamma, beta, running_mean, running_var), each (C,)
    returns: (N, C, H, W) float32
    """
    N, C, H, W = x_nchw.shape
    HW = H * W

    B = images_per_block or _images_per_block(N, C, _num_tensorcores())
    if N % B != 0:
        raise ValueError("images_per_block must divide the batch")
    # Mosaic layout rule: the sublane extent of a block must be a multiple of 8
    # or cover the whole axis.  Fall back to a single grid step otherwise.
    if (B * C) % 8 != 0 and B != N:
        B = N
    BC = B * C

    # --- glue: free reshape of NCHW + tiny constant prep --------------------
    x = x_nchw.reshape(N * C, HW)                     # contiguous -> free

    def pack_weight(w_oihw):
        # (cout, cin, dy, dx) -> (k=dy*3+dx, cout, cin)
        wk = jnp.transpose(w_oihw, (2, 3, 0, 1)).reshape(9, C, C).astype(jnp.float32)
        # Block-diagonal over the B images packed on the sublane axis:
        # W[b*C+co, k*B*C + b'*C + ci] = delta(b,b') * wk[k, co, ci]
        eye = jnp.eye(B, dtype=jnp.float32)
        return jnp.einsum('bq,koc->bokqc', eye, wk).reshape(BC, 9 * BC)

    w_stack = jnp.stack([pack_weight(w1_oihw), pack_weight(w2_oihw)])  # (2, BC, 9BC)

    def fold_bn(p):
        g, b, m, v = p
        s = (g / jnp.sqrt(v + eps)).astype(jnp.float32)
        return jnp.tile(s, B), jnp.tile((b - m * s).astype(jnp.float32), B)

    s1, b1 = fold_bn(bn1)
    s2, b2 = fold_bn(bn2)
    bn_packed = jnp.stack([s1, b1, s2, b2], axis=1)   # (BC, 4)

    kernel = functools.partial(_residual_kernel, H=H, W=W, C=C, B=B)

    out = pl.pallas_call(
        kernel,
        out_shape=jax.ShapeDtypeStruct((N * C, HW), jnp.float32),
        grid_spec=pltpu.PrefetchScalarGridSpec(
            num_scalar_prefetch=0,
            grid=(N // B,),
            in_specs=[
                pl.BlockSpec((BC, HW), lambda n: (n, 0)),
                pl.BlockSpec((2, BC, 9 * BC), lambda n: (0, 0, 0)),
                pl.BlockSpec((BC, 4), lambda n: (0, 0)),
            ],
            out_specs=pl.BlockSpec((BC, HW), lambda n: (n, 0)),
        ),
        compiler_params=pltpu.CompilerParams(
            dimension_semantics=("parallel",),
            vmem_limit_bytes=_vmem_limit_bytes(),
        ),
    )(x, w_stack, bn_packed)

    return out.reshape(N, C, H, W)


def _reference(x, w1, w2, bn1, bn2, eps=1e-5):
    """Pure-JAX reference (NCHW, matches PyTorch eval-mode semantics)."""
    def bn(h, p):
        g, b, m, v = p
        sh = (1, -1, 1, 1)
        return (h - m.reshape(sh)) / jnp.sqrt(v.reshape(sh) + eps) * \
            g.reshape(sh) + b.reshape(sh)

    dn = ('NCHW', 'OIHW', 'NCHW')
    h = lax.conv_general_dilated(x, w1, (1, 1), 'SAME', dimension_numbers=dn)
    h = jax.nn.relu(bn(h, bn1))
    h = lax.conv_general_dilated(h, w2, (1, 1), 'SAME', dimension_numbers=dn)
    h = bn(h, bn2)
    return jax.nn.relu(h + x)


if __name__ == "__main__":
    N, C, H, W = 2, 4, 16, 16
    key = jax.random.PRNGKey(0)
    kx, kw1, kw2, kg1, kb1, km1, kv1, kg2, kb2, km2, kv2 = jax.random.split(key, 11)

    x = jax.random.normal(kx, (N, C, H, W), jnp.float32)
    w1 = jax.random.normal(kw1, (C, C, 3, 3), jnp.float32) * 0.2
    w2 = jax.random.normal(kw2, (C, C, 3, 3), jnp.float32) * 0.2
    bn1 = (jax.random.normal(kg1, (C,)) * 0.1 + 1.0,
           jax.random.normal(kb1, (C,)) * 0.1,
           jax.random.normal(km1, (C,)) * 0.1,
           jax.random.uniform(kv1, (C,), minval=0.5, maxval=1.5))
    bn2 = (jax.random.normal(kg2, (C,)) * 0.1 + 1.0,
           jax.random.normal(kb2, (C,)) * 0.1,
           jax.random.normal(km2, (C,)) * 0.1,
           jax.random.uniform(kv2, (C,), minval=0.5, maxval=1.5))

    out = residual_layer(x, w1, w2, bn1, bn2)
    out = jax.block_until_ready(out)

    ref = _reference(x, w1, w2, bn1, bn2)
    assert out.shape == (N, C, H, W)
    # f32 end-to-end now (no bf16 activation cast); tolerance only covers MXU
    # accumulation-order / internal-pass differences, not a dtype demotion.
    assert jnp.allclose(out, ref, atol=3e-2, rtol=1e-2), \
        f"max err {jnp.max(jnp.abs(out - ref))}"

    print("KERNEL_OK")
</pallas_src>

<mosaic_0001>
module attributes {stable_mosaic.version = 11 : i64} {
  func.func @_residual_kernel(%arg0: i32, %arg1: memref<8x256xf32, #tpu.memory_space<vmem>>, %arg2: memref<2x8x72xf32, #tpu.memory_space<vmem>>, %arg3: memref<8x4xf32, #tpu.memory_space<vmem>>, %arg4: memref<8x256xf32, #tpu.memory_space<vmem>>) attributes {dimension_semantics = [#tpu.dimension_semantics<parallel>], iteration_bounds = array<i64: 1>, scalar_prefetch = 0 : i64, scratch_operands = 0 : i64, tpu.core_type = #tpu.core_type<tc>, window_params = [{transform_indices = @transform_0, window_bounds = array<i64: 8, 256>}, {pipeline_mode = #tpu.pipeline_mode<synchronous>, transform_indices = @transform_1, window_bounds = array<i64: 2, 8, 72>}, {pipeline_mode = #tpu.pipeline_mode<synchronous>, transform_indices = @transform_2, window_bounds = array<i64: 8, 4>}, {transform_indices = @transform_3, window_bounds = array<i64: 8, 256>}]} {
    %0 = tpu.iota {dimensions = array<i32: 1>} : vector<1x256xi32>
    %c15_i32 = arith.constant 15 : i32
    %1 = vector.broadcast %c15_i32 : i32 to vector<1x256xi32>
    %2 = arith.andi %0, %1 : vector<1x256xi32>
    %c4_i32 = arith.constant 4 : i32
    %3 = vector.broadcast %c4_i32 : i32 to vector<1x256xi32>
    %4 = arith.shrsi %0, %3 : vector<1x256xi32>
    %c-1_i32 = arith.constant -1 : i32
    %5 = vector.broadcast %c-1_i32 : i32 to vector<1x256xi32>
    %6 = arith.addi %4, %5 : vector<1x256xi32>
    %c-1_i32_0 = arith.constant -1 : i32
    %7 = vector.broadcast %c-1_i32_0 : i32 to vector<1x256xi32>
    %8 = arith.addi %2, %7 : vector<1x256xi32>
    %c0_i32 = arith.constant 0 : i32
    %9 = vector.broadcast %c0_i32 : i32 to vector<1x256xi32>
    %10 = arith.cmpi sge, %6, %9 : vector<1x256xi32>
    %c16_i32 = arith.constant 16 : i32
    %11 = vector.broadcast %c16_i32 : i32 to vector<1x256xi32>
    %12 = arith.cmpi slt, %6, %11 : vector<1x256xi32>
    %13 = arith.andi %10, %12 : vector<1x256xi1>
    %c0_i32_1 = arith.constant 0 : i32
    %14 = vector.broadcast %c0_i32_1 : i32 to vector<1x256xi32>
    %15 = arith.cmpi sge, %8, %14 : vector<1x256xi32>
    %16 = arith.andi %13, %15 : vector<1x256xi1>
    %c16_i32_2 = arith.constant 16 : i32
    %17 = vector.broadcast %c16_i32_2 : i32 to vector<1x256xi32>
    %18 = arith.cmpi slt, %8, %17 : vector<1x256xi32>
    %19 = arith.andi %16, %18 : vector<1x256xi1>
    %c-1_i32_3 = arith.constant -1 : i32
    %20 = vector.broadcast %c-1_i32_3 : i32 to vector<1x256xi32>
    %21 = arith.addi %4, %20 : vector<1x256xi32>
    %c0_i32_4 = arith.constant 0 : i32
    %22 = vector.broadcast %c0_i32_4 : i32 to vector<1x256xi32>
    %23 = arith.addi %2, %22 : vector<1x256xi32>
    %c0_i32_5 = arith.constant 0 : i32
    %24 = vector.broadcast %c0_i32_5 : i32 to vector<1x256xi32>
    %25 = arith.cmpi sge, %21, %24 : vector<1x256xi32>
    %c16_i32_6 = arith.constant 16 : i32
    %26 = vector.broadcast %c16_i32_6 : i32 to vector<1x256xi32>
    %27 = arith.cmpi slt, %21, %26 : vector<1x256xi32>
    %28 = arith.andi %25, %27 : vector<1x256xi1>
    %c0_i32_7 = arith.constant 0 : i32
    %29 = vector.broadcast %c0_i32_7 : i32 to vector<1x256xi32>
    %30 = arith.cmpi sge, %23, %29 : vector<1x256xi32>
    %31 = arith.andi %28, %30 : vector<1x256xi1>
    %c16_i32_8 = arith.constant 16 : i32
    %32 = vector.broadcast %c16_i32_8 : i32 to vector<1x256xi32>
    %33 = arith.cmpi slt, %23, %32 : vector<1x256xi32>
    %34 = arith.andi %31, %33 : vector<1x256xi1>
    %c-1_i32_9 = arith.constant -1 : i32
    %35 = vector.broadcast %c-1_i32_9 : i32 to vector<1x256xi32>
    %36 = arith.addi %4, %35 : vector<1x256xi32>
    %c1_i32 = arith.constant 1 : i32
    %37 = vector.broadcast %c1_i32 : i32 to vector<1x256xi32>
    %38 = arith.addi %2, %37 : vector<1x256xi32>
    %c0_i32_10 = arith.constant 0 : i32
    %39 = vector.broadcast %c0_i32_10 : i32 to vector<1x256xi32>
    %40 = arith.cmpi sge, %36, %39 : vector<1x256xi32>
    %c16_i32_11 = arith.constant 16 : i32
    %41 = vector.broadcast %c16_i32_11 : i32 to vector<1x256xi32>
    %42 = arith.cmpi slt, %36, %41 : vector<1x256xi32>
    %43 = arith.andi %40, %42 : vector<1x256xi1>
    %c0_i32_12 = arith.constant 0 : i32
    %44 = vector.broadcast %c0_i32_12 : i32 to vector<1x256xi32>
    %45 = arith.cmpi sge, %38, %44 : vector<1x256xi32>
    %46 = arith.andi %43, %45 : vector<1x256xi1>
    %c16_i32_13 = arith.constant 16 : i32
    %47 = vector.broadcast %c16_i32_13 : i32 to vector<1x256xi32>
    %48 = arith.cmpi slt, %38, %47 : vector<1x256xi32>
    %49 = arith.andi %46, %48 : vector<1x256xi1>
    %c0_i32_14 = arith.constant 0 : i32
    %50 = vector.broadcast %c0_i32_14 : i32 to vector<1x256xi32>
    %51 = arith.addi %4, %50 : vector<1x256xi32>
    %c-1_i32_15 = arith.constant -1 : i32
    %52 = vector.broadcast %c-1_i32_15 : i32 to vector<1x256xi32>
    %53 = arith.addi %2, %52 : vector<1x256xi32>
    %c0_i32_16 = arith.constant 0 : i32
    %54 = vector.broadcast %c0_i32_16 : i32 to vector<1x256xi32>
    %55 = arith.cmpi sge, %51, %54 : vector<1x256xi32>
    %c16_i32_17 = arith.constant 16 : i32
    %56 = vector.broadcast %c16_i32_17 : i32 to vector<1x256xi32>
    %57 = arith.cmpi slt, %51, %56 : vector<1x256xi32>
    %58 = arith.andi %55, %57 : vector<1x256xi1>
    %c0_i32_18 = arith.constant 0 : i32
    %59 = vector.broadcast %c0_i32_18 : i32 to vector<1x256xi32>
    %60 = arith.cmpi sge, %53, %59 : vector<1x256xi32>
    %61 = arith.andi %58, %60 : vector<1x256xi1>
    %c16_i32_19 = arith.constant 16 : i32
    %62 = vector.broadcast %c16_i32_19 : i32 to vector<1x256xi32>
    %63 = arith.cmpi slt, %53, %62 : vector<1x256xi32>
    %64 = arith.andi %61, %63 : vector<1x256xi1>
    %c0_i32_20 = arith.constant 0 : i32
    %65 = vector.broadcast %c0_i32_20 : i32 to vector<1x256xi32>
    %66 = arith.addi %4, %65 : vector<1x256xi32>
    %c1_i32_21 = arith.constant 1 : i32
    %67 = vector.broadcast %c1_i32_21 : i32 to vector<1x256xi32>
    %68 = arith.addi %2, %67 : vector<1x256xi32>
    %c0_i32_22 = arith.constant 0 : i32
    %69 = vector.broadcast %c0_i32_22 : i32 to vector<1x256xi32>
    %70 = arith.cmpi sge, %66, %69 : vector<1x256xi32>
    %c16_i32_23 = arith.constant 16 : i32
    %71 = vector.broadcast %c16_i32_23 : i32 to vector<1x256xi32>
    %72 = arith.cmpi slt, %66, %71 : vector<1x256xi32>
    %73 = arith.andi %70, %72 : vector<1x256xi1>
    %c0_i32_24 = arith.constant 0 : i32
    %74 = vector.broadcast %c0_i32_24 : i32 to vector<1x256xi32>
    %75 = arith.cmpi sge, %68, %74 : vector<1x256xi32>
    %76 = arith.andi %73, %75 : vector<1x256xi1>
    %c16_i32_25 = arith.constant 16 : i32
    %77 = vector.broadcast %c16_i32_25 : i32 to vector<1x256xi32>
    %78 = arith.cmpi slt, %68, %77 : vector<1x256xi32>
    %79 = arith.andi %76, %78 : vector<1x256xi1>
    %c1_i32_26 = arith.constant 1 : i32
    %80 = vector.broadcast %c1_i32_26 : i32 to vector<1x256xi32>
    %81 = arith.addi %4, %80 : vector<1x256xi32>
    %c-1_i32_27 = arith.constant -1 : i32
    %82 = vector.broadcast %c-1_i32_27 : i32 to vector<1x256xi32>
    %83 = arith.addi %2, %82 : vector<1x256xi32>
    %c0_i32_28 = arith.constant 0 : i32
    %84 = vector.broadcast %c0_i32_28 : i32 to vector<1x256xi32>
    %85 = arith.cmpi sge, %81, %84 : vector<1x256xi32>
    %c16_i32_29 = arith.constant 16 : i32
    %86 = vector.broadcast %c16_i32_29 : i32 to vector<1x256xi32>
    %87 = arith.cmpi slt, %81, %86 : vector<1x256xi32>
    %88 = arith.andi %85, %87 : vector<1x256xi1>
    %c0_i32_30 = arith.constant 0 : i32
    %89 = vector.broadcast %c0_i32_30 : i32 to vector<1x256xi32>
    %90 = arith.cmpi sge, %83, %89 : vector<1x256xi32>
    %91 = arith.andi %88, %90 : vector<1x256xi1>
    %c16_i32_31 = arith.constant 16 : i32
    %92 = vector.broadcast %c16_i32_31 : i32 to vector<1x256xi32>
    %93 = arith.cmpi slt, %83, %92 : vector<1x256xi32>
    %94 = arith.andi %91, %93 : vector<1x256xi1>
    %c1_i32_32 = arith.constant 1 : i32
    %95 = vector.broadcast %c1_i32_32 : i32 to vector<1x256xi32>
    %96 = arith.addi %4, %95 : vector<1x256xi32>
    %c0_i32_33 = arith.constant 0 : i32
    %97 = vector.broadcast %c0_i32_33 : i32 to vector<1x256xi32>
    %98 = arith.addi %2, %97 : vector<1x256xi32>
    %c0_i32_34 = arith.constant 0 : i32
    %99 = vector.broadcast %c0_i32_34 : i32 to vector<1x256xi32>
    %100 = arith.cmpi sge, %96, %99 : vector<1x256xi32>
    %c16_i32_35 = arith.constant 16 : i32
    %101 = vector.broadcast %c16_i32_35 : i32 to vector<1x256xi32>
    %102 = arith.cmpi slt, %96, %101 : vector<1x256xi32>
    %103 = arith.andi %100, %102 : vector<1x256xi1>
    %c0_i32_36 = arith.constant 0 : i32
    %104 = vector.broadcast %c0_i32_36 : i32 to vector<1x256xi32>
    %105 = arith.cmpi sge, %98, %104 : vector<1x256xi32>
    %106 = arith.andi %103, %105 : vector<1x256xi1>
    %c16_i32_37 = arith.constant 16 : i32
    %107 = vector.broadcast %c16_i32_37 : i32 to vector<1x256xi32>
    %108 = arith.cmpi slt, %98, %107 : vector<1x256xi32>
    %109 = arith.andi %106, %108 : vector<1x256xi1>
    %c1_i32_38 = arith.constant 1 : i32
    %110 = vector.broadcast %c1_i32_38 : i32 to vector<1x256xi32>
    %111 = arith.addi %4, %110 : vector<1x256xi32>
    %c1_i32_39 = arith.constant 1 : i32
    %112 = vector.broadcast %c1_i32_39 : i32 to vector<1x256xi32>
    %113 = arith.addi %2, %112 : vector<1x256xi32>
    %c0_i32_40 = arith.constant 0 : i32
    %114 = vector.broadcast %c0_i32_40 : i32 to vector<1x256xi32>
    %115 = arith.cmpi sge, %111, %114 : vector<1x256xi32>
    %c16_i32_41 = arith.constant 16 : i32
    %116 = vector.broadcast %c16_i32_41 : i32 to vector<1x256xi32>
    %117 = arith.cmpi slt, %111, %116 : vector<1x256xi32>
    %118 = arith.andi %115, %117 : vector<1x256xi1>
    %c0_i32_42 = arith.constant 0 : i32
    %119 = vector.broadcast %c0_i32_42 : i32 to vector<1x256xi32>
    %120 = arith.cmpi sge, %113, %119 : vector<1x256xi32>
    %121 = arith.andi %118, %120 : vector<1x256xi1>
    %c16_i32_43 = arith.constant 16 : i32
    %122 = vector.broadcast %c16_i32_43 : i32 to vector<1x256xi32>
    %123 = arith.cmpi slt, %113, %122 : vector<1x256xi32>
    %124 = arith.andi %121, %123 : vector<1x256xi1>
    %c0 = arith.constant 0 : index
    %c0_44 = arith.constant 0 : index
    %c0_45 = arith.constant 0 : index
    %125 = vector.load %arg2[%c0, %c0_44, %c0_45] : memref<2x8x72xf32, #tpu.memory_space<vmem>>, vector<1x8x72xf32>
    %126 = vector.shape_cast %125 : vector<1x8x72xf32> to vector<8x72xf32>
    %c1 = arith.constant 1 : index
    %c0_46 = arith.constant 0 : index
    %c0_47 = arith.constant 0 : index
    %127 = vector.load %arg2[%c1, %c0_46, %c0_47] : memref<2x8x72xf32, #tpu.memory_space<vmem>>, vector<1x8x72xf32>
    %128 = vector.shape_cast %127 : vector<1x8x72xf32> to vector<8x72xf32>
    %c0_48 = arith.constant 0 : index
    %c0_49 = arith.constant 0 : index
    %129 = vector.load %arg3[%c0_48, %c0_49] : memref<8x4xf32, #tpu.memory_space<vmem>>, vector<8x1xf32>
    %c0_50 = arith.constant 0 : index
    %c1_51 = arith.constant 1 : index
    %130 = vector.load %arg3[%c0_50, %c1_51] : memref<8x4xf32, #tpu.memory_space<vmem>>, vector<8x1xf32>
    %c0_52 = arith.constant 0 : index
    %c2 = arith.constant 2 : index
    %131 = vector.load %arg3[%c0_52, %c2] : memref<8x4xf32, #tpu.memory_space<vmem>>, vector<8x1xf32>
    %c0_53 = arith.constant 0 : index
    %c3 = arith.constant 3 : index
    %132 = vector.load %arg3[%c0_53, %c3] : memref<8x4xf32, #tpu.memory_space<vmem>>, vector<8x1xf32>
    %c0_54 = arith.constant 0 : index
    %c0_55 = arith.constant 0 : index
    %133 = vector.load %arg1[%c0_54, %c0_55] : memref<8x256xf32, #tpu.memory_space<vmem>>, vector<8x256xf32>
    %c17_i32 = arith.constant 17 : i32
    %134 = tpu.dynamic_rotate %133 by %c17_i32 dim 1 : vector<8x256xf32>, i32 -> vector<8x256xf32>
    %cst = arith.constant 0.000000e+00 : f32
    %135 = vector.shape_cast %19 : vector<1x256xi1> to vector<1x256xi1>
    %136 = vector.broadcast %135 : vector<1x256xi1> to vector<8x256xi1>
    %137 = vector.broadcast %cst : f32 to vector<8x256xf32>
    %138 = arith.select %136, %134, %137 : vector<8x256xi1>, vector<8x256xf32>
    %c16_i32_56 = arith.constant 16 : i32
    %139 = tpu.dynamic_rotate %133 by %c16_i32_56 dim 1 : vector<8x256xf32>, i32 -> vector<8x256xf32>
    %cst_57 = arith.constant 0.000000e+00 : f32
    %140 = vector.shape_cast %34 : vector<1x256xi1> to vector<1x256xi1>
    %141 = vector.broadcast %140 : vector<1x256xi1> to vector<8x256xi1>
    %142 = vector.broadcast %cst_57 : f32 to vector<8x256xf32>
    %143 = arith.select %141, %139, %142 : vector<8x256xi1>, vector<8x256xf32>
    %c15_i32_58 = arith.constant 15 : i32
    %144 = tpu.dynamic_rotate %133 by %c15_i32_58 dim 1 : vector<8x256xf32>, i32 -> vector<8x256xf32>
    %cst_59 = arith.constant 0.000000e+00 : f32
    %145 = vector.shape_cast %49 : vector<1x256xi1> to vector<1x256xi1>
    %146 = vector.broadcast %145 : vector<1x256xi1> to vector<8x256xi1>
    %147 = vector.broadcast %cst_59 : f32 to vector<8x256xf32>
    %148 = arith.select %146, %144, %147 : vector<8x256xi1>, vector<8x256xf32>
    %c1_i32_60 = arith.constant 1 : i32
    %149 = tpu.dynamic_rotate %133 by %c1_i32_60 dim 1 : vector<8x256xf32>, i32 -> vector<8x256xf32>
    %cst_61 = arith.constant 0.000000e+00 : f32
    %150 = vector.shape_cast %64 : vector<1x256xi1> to vector<1x256xi1>
    %151 = vector.broadcast %150 : vector<1x256xi1> to vector<8x256xi1>
    %152 = vector.broadcast %cst_61 : f32 to vector<8x256xf32>
    %153 = arith.select %151, %149, %152 : vector<8x256xi1>, vector<8x256xf32>
    %c255_i32 = arith.constant 255 : i32
    %154 = tpu.dynamic_rotate %133 by %c255_i32 dim 1 : vector<8x256xf32>, i32 -> vector<8x256xf32>
    %cst_62 = arith.constant 0.000000e+00 : f32
    %155 = vector.shape_cast %79 : vector<1x256xi1> to vector<1x256xi1>
    %156 = vector.broadcast %155 : vector<1x256xi1> to vector<8x256xi1>
    %157 = vector.broadcast %cst_62 : f32 to vector<8x256xf32>
    %158 = arith.select %156, %154, %157 : vector<8x256xi1>, vector<8x256xf32>
    %c241_i32 = arith.constant 241 : i32
    %159 = tpu.dynamic_rotate %133 by %c241_i32 dim 1 : vector<8x256xf32>, i32 -> vector<8x256xf32>
    %cst_63 = arith.constant 0.000000e+00 : f32
    %160 = vector.shape_cast %94 : vector<1x256xi1> to vector<1x256xi1>
    %161 = vector.broadcast %160 : vector<1x256xi1> to vector<8x256xi1>
    %162 = vector.broadcast %cst_63 : f32 to vector<8x256xf32>
    %163 = arith.select %161, %159, %162 : vector<8x256xi1>, vector<8x256xf32>
    %c240_i32 = arith.constant 240 : i32
    %164 = tpu.dynamic_rotate %133 by %c240_i32 dim 1 : vector<8x256xf32>, i32 -> vector<8x256xf32>
    %cst_64 = arith.constant 0.000000e+00 : f32
    %165 = vector.shape_cast %109 : vector<1x256xi1> to vector<1x256xi1>
    %166 = vector.broadcast %165 : vector<1x256xi1> to vector<8x256xi1>
    %167 = vector.broadcast %cst_64 : f32 to vector<8x256xf32>
    %168 = arith.select %166, %164, %167 : vector<8x256xi1>, vector<8x256xf32>
    %c239_i32 = arith.constant 239 : i32
    %169 = tpu.dynamic_rotate %133 by %c239_i32 dim 1 : vector<8x256xf32>, i32 -> vector<8x256xf32>
    %cst_65 = arith.constant 0.000000e+00 : f32
    %170 = vector.shape_cast %124 : vector<1x256xi1> to vector<1x256xi1>
    %171 = vector.broadcast %170 : vector<1x256xi1> to vector<8x256xi1>
    %172 = vector.broadcast %cst_65 : f32 to vector<8x256xf32>
    %173 = arith.select %171, %169, %172 : vector<8x256xi1>, vector<8x256xf32>
    %174 = tpu.concatenate %138, %143, %148, %153, %133, %158, %163, %168, %173 in 0 : vector<8x256xf32>, vector<8x256xf32>, vector<8x256xf32>, vector<8x256xf32>, vector<8x256xf32>, vector<8x256xf32>, vector<8x256xf32>, vector<8x256xf32>, vector<8x256xf32> -> vector<72x256xf32>
    %cst_66 = arith.constant dense<0.000000e+00> : vector<8x256xf32>
    %175 = tpu.matmul %126, %174, %cst_66 {dimension_numbers = #tpu.dot_dimension_numbers<[1], [0], [0], [1], [0, 0, 1, 1], [], []>} : vector<8x72xf32>, vector<72x256xf32>, vector<8x256xf32> -> vector<8x256xf32>
    %176 = vector.broadcast %129 : vector<8x1xf32> to vector<8x256xf32>
    %177 = arith.mulf %175, %176 : vector<8x256xf32>
    %178 = vector.broadcast %130 : vector<8x1xf32> to vector<8x256xf32>
    %179 = arith.addf %177, %178 : vector<8x256xf32>
    %cst_67 = arith.constant 0.000000e+00 : f32
    %180 = vector.broadcast %cst_67 : f32 to vector<8x256xf32>
    %181 = arith.maximumf %179, %180 : vector<8x256xf32>
    %c17_i32_68 = arith.constant 17 : i32
    %182 = tpu.dynamic_rotate %181 by %c17_i32_68 dim 1 : vector<8x256xf32>, i32 -> vector<8x256xf32>
    %cst_69 = arith.constant 0.000000e+00 : f32
    %183 = vector.shape_cast %19 : vector<1x256xi1> to vector<1x256xi1>
    %184 = vector.broadcast %183 : vector<1x256xi1> to vector<8x256xi1>
    %185 = vector.broadcast %cst_69 : f32 to vector<8x256xf32>
    %186 = arith.select %184, %182, %185 : vector<8x256xi1>, vector<8x256xf32>
    %c16_i32_70 = arith.constant 16 : i32
    %187 = tpu.dynamic_rotate %181 by %c16_i32_70 dim 1 : vector<8x256xf32>, i32 -> vector<8x256xf32>
    %cst_71 = arith.constant 0.000000e+00 : f32
    %188 = vector.shape_cast %34 : vector<1x256xi1> to vector<1x256xi1>
    %189 = vector.broadcast %188 : vector<1x256xi1> to vector<8x256xi1>
    %190 = vector.broadcast %cst_71 : f32 to vector<8x256xf32>
    %191 = arith.select %189, %187, %190 : vector<8x256xi1>, vector<8x256xf32>
    %c15_i32_72 = arith.constant 15 : i32
    %192 = tpu.dynamic_rotate %181 by %c15_i32_72 dim 1 : vector<8x256xf32>, i32 -> vector<8x256xf32>
    %cst_73 = arith.constant 0.000000e+00 : f32
    %193 = vector.shape_cast %49 : vector<1x256xi1> to vector<1x256xi1>
    %194 = vector.broadcast %193 : vector<1x256xi1> to vector<8x256xi1>
    %195 = vector.broadcast %cst_73 : f32 to vector<8x256xf32>
    %196 = arith.select %194, %192, %195 : vector<8x256xi1>, vector<8x256xf32>
    %c1_i32_74 = arith.constant 1 : i32
    %197 = tpu.dynamic_rotate %181 by %c1_i32_74 dim 1 : vector<8x256xf32>, i32 -> vector<8x256xf32>
    %cst_75 = arith.constant 0.000000e+00 : f32
    %198 = vector.shape_cast %64 : vector<1x256xi1> to vector<1x256xi1>
    %199 = vector.broadcast %198 : vector<1x256xi1> to vector<8x256xi1>
    %200 = vector.broadcast %cst_75 : f32 to vector<8x256xf32>
    %201 = arith.select %199, %197, %200 : vector<8x256xi1>, vector<8x256xf32>
    %c255_i32_76 = arith.constant 255 : i32
    %202 = tpu.dynamic_rotate %181 by %c255_i32_76 dim 1 : vector<8x256xf32>, i32 -> vector<8x256xf32>
    %cst_77 = arith.constant 0.000000e+00 : f32
    %203 = vector.shape_cast %79 : vector<1x256xi1> to vector<1x256xi1>
    %204 = vector.broadcast %203 : vector<1x256xi1> to vector<8x256xi1>
    %205 = vector.broadcast %cst_77 : f32 to vector<8x256xf32>
    %206 = arith.select %204, %202, %205 : vector<8x256xi1>, vector<8x256xf32>
    %c241_i32_78 = arith.constant 241 : i32
    %207 = tpu.dynamic_rotate %181 by %c241_i32_78 dim 1 : vector<8x256xf32>, i32 -> vector<8x256xf32>
    %cst_79 = arith.constant 0.000000e+00 : f32
    %208 = vector.shape_cast %94 : vector<1x256xi1> to vector<1x256xi1>
    %209 = vector.broadcast %208 : vector<1x256xi1> to vector<8x256xi1>
    %210 = vector.broadcast %cst_79 : f32 to vector<8x256xf32>
    %211 = arith.select %209, %207, %210 : vector<8x256xi1>, vector<8x256xf32>
    %c240_i32_80 = arith.constant 240 : i32
    %212 = tpu.dynamic_rotate %181 by %c240_i32_80 dim 1 : vector<8x256xf32>, i32 -> vector<8x256xf32>
    %cst_81 = arith.constant 0.000000e+00 : f32
    %213 = vector.shape_cast %109 : vector<1x256xi1> to vector<1x256xi1>
    %214 = vector.broadcast %213 : vector<1x256xi1> to vector<8x256xi1>
    %215 = vector.broadcast %cst_81 : f32 to vector<8x256xf32>
    %216 = arith.select %214, %212, %215 : vector<8x256xi1>, vector<8x256xf32>
    %c239_i32_82 = arith.constant 239 : i32
    %217 = tpu.dynamic_rotate %181 by %c239_i32_82 dim 1 : vector<8x256xf32>, i32 -> vector<8x256xf32>
    %cst_83 = arith.constant 0.000000e+00 : f32
    %218 = vector.shape_cast %124 : vector<1x256xi1> to vector<1x256xi1>
    %219 = vector.broadcast %218 : vector<1x256xi1> to vector<8x256xi1>
    %220 = vector.broadcast %cst_83 : f32 to vector<8x256xf32>
    %221 = arith.select %219, %217, %220 : vector<8x256xi1>, vector<8x256xf32>
    %222 = tpu.concatenate %186, %191, %196, %201, %181, %206, %211, %216, %221 in 0 : vector<8x256xf32>, vector<8x256xf32>, vector<8x256xf32>, vector<8x256xf32>, vector<8x256xf32>, vector<8x256xf32>, vector<8x256xf32>, vector<8x256xf32>, vector<8x256xf32> -> vector<72x256xf32>
    %cst_84 = arith.constant dense<0.000000e+00> : vector<8x256xf32>
    %223 = tpu.matmul %128, %222, %cst_84 {dimension_numbers = #tpu.dot_dimension_numbers<[1], [0], [0], [1], [0, 0, 1, 1], [], []>} : vector<8x72xf32>, vector<72x256xf32>, vector<8x256xf32> -> vector<8x256xf32>
    %224 = vector.broadcast %131 : vector<8x1xf32> to vector<8x256xf32>
    %225 = arith.mulf %223, %224 : vector<8x256xf32>
    %226 = vector.broadcast %132 : vector<8x1xf32> to vector<8x256xf32>
    %227 = arith.addf %225, %226 : vector<8x256xf32>
    %228 = arith.addf %227, %133 : vector<8x256xf32>
    %cst_85 = arith.constant 0.000000e+00 : f32
    %229 = vector.broadcast %cst_85 : f32 to vector<8x256xf32>
    %230 = arith.maximumf %228, %229 : vector<8x256xf32>
    %c0_86 = arith.constant 0 : index
    %c0_87 = arith.constant 0 : index
    %231 = vector.load %arg4[%c0_86, %c0_87] : memref<8x256xf32, #tpu.memory_space<vmem>>, vector<8x256xf32>
    tpu.vector_store %arg4[%c0_86, %c0_87], %230 {strides = array<i32>} : memref<8x256xf32, #tpu.memory_space<vmem>>, vector<8x256xf32>,
    return
  }
  func.func @transform_0(%arg0: i32) -> (i32, i32) {
    %c0_i32 = arith.constant 0 : i32
    %c0_i32_0 = arith.constant 0 : i32
    return %arg0, %c0_i32 : i32, i32
  }
  func.func @transform_1(%arg0: i32) -> (i32, i32, i32) {
    %c0_i32 = arith.constant 0 : i32
    %c0_i32_0 = arith.constant 0 : i32
    %c0_i32_1 = arith.constant 0 : i32
    %c0_i32_2 = arith.constant 0 : i32
    return %c0_i32, %c0_i32_0, %c0_i32_1 : i32, i32, i32
  }
  func.func @transform_2(%arg0: i32) -> (i32, i32) {
    %c0_i32 = arith.constant 0 : i32
    %c0_i32_0 = arith.constant 0 : i32
    %c0_i32_1 = arith.constant 0 : i32
    return %c0_i32, %c0_i32_0 : i32, i32
  }
  func.func @transform_3(%arg0: i32) -> (i32, i32) {
    %c0_i32 = arith.constant 0 : i32
    %c0_i32_0 = arith.constant 0 : i32
    return %arg0, %c0_i32 : i32, i32
  }
}

</mosaic_0001>

<llo_original>
// kernel: tpu_custom_call.1
$region0: #{tpu_custom_call.1}
  #allocation0 [shape = 'u32[]', space=smem, size = 0x4, offset = 0x4, fixed_abs, tag = 'smem constant byte address 0x4 - core index']
  #allocation1 [shape = 'u32[144,128]{1,0:T(1,128)}', space=vmem, size = 0x12000, scoped, tag = 'internal scratch']
  %s0 = inlined_call_operand.hbm [shape: f32[8,256], index: 0, kind: input, shape index: {}]
  %s1 = inlined_call_operand.hbm [shape: f32[2,8,72], index: 1, kind: input, shape index: {}]
  %s2 = inlined_call_operand.vmem [shape: f32[8,4], index: 2, kind: input, shape index: {}]
  %s3 = inlined_call_operand.hbm [shape: f32[8,256], index: 3, kind: output, shape index: {}]
  %s4 = sld [smem:[#allocation0]]
  $region30: #{tpu_custom_call.1} parent=0
    _
  %s6 = ssub.s32 1, %s4
  %s7 = scalar_select 0, %s6, %s4
  $region1: #{tpu_custom_call.1} parent=0
    #allocation2 [shape = 'u8[8192]{0}', space=vmem, size = 0x2000, scoped, tag = 'input window, operand 0, single buffered']
    #allocation3 [shape = 's32[1]{0}', space=sflag, size = 0x4, scoped, tag = 'scoped memory for tpu_custom_call.1']
    #allocation4 [shape = 's32[1]{0}', space=sflag, size = 0x4, scoped, tag = 'scoped memory for tpu_custom_call.1']
    #allocation5 [shape = 'u8[8192]{0}', space=vmem, size = 0x2000, scoped, tag = 'input window, operand 1, single buffered']
    #allocation6 [shape = 's32[1]{0}', space=sflag, size = 0x4, scoped, tag = 'scoped memory for tpu_custom_call.1']
    #allocation7 [shape = 'u8[8192]{0}', space=vmem, size = 0x2000, scoped, tag = 'output window, operand 0, single buffered']
    %8 = vsyncpa [#allocation3], 0
    %9 = vsyncpa [#allocation6], 0
    %10 = vsyncpa [#allocation4], 0
    // Predicated region
    $region2: #{tpu_custom_call.1} parent=1 // pred_check
      _
    $region3: #{tpu_custom_call.1} parent=1 // pred_check_branch
      %12 = sbr.rel (0) target = $region5
    $region4: #{tpu_custom_call.1} parent=1 // pred_region
      %s14 = ssub.s32 256, 256
      %15 = vsyncadd [#allocation3], %s14
      %s17 = sshll.u32 [#allocation2], 4
      %s18 = int_to_ptr.vmem [resolvable:$true] %s17
      %20 = dma.hbm_to_vmem [thread:$0]  %s0, 256, %s18, [#allocation3]
    $region5: #{tpu_custom_call.1} parent=1 // pred_fallthru
      _
    // Predicated region
    $region6: #{tpu_custom_call.1} parent=1 // pred_check
      _
    $region7: #{tpu_custom_call.1} parent=1 // pred_check_branch
      %22 = sbr.rel (0) target = $region9
    $region8: #{tpu_custom_call.1} parent=1 // pred_region
      %s24 = ssub.s32 256, 256
      %25 = vsyncadd [#allocation6], %s24
      %s26 = sshll.u32 [#allocation5], 4
      %s27 = int_to_ptr.vmem [resolvable:$true] %s26
      %32 = dma.hbm_to_vmem [thread:$0]  %s1, 256, %s27, [#allocation6], 128, 128, 8
    $region9: #{tpu_custom_call.1} parent=1 // pred_fallthru
      _
    // Predicated region
    $region10: #{tpu_custom_call.1} parent=1 // pred_check
      _
    $region11: #{tpu_custom_call.1} parent=1 // pred_check_branch
      %34 = sbr.rel (0) target = $region13
    $region12: #{tpu_custom_call.1} parent=1 // pred_region
      _
    $region13: #{tpu_custom_call.1} parent=1 // pred_fallthru
      _
    // Predicated region
    $region14: #{tpu_custom_call.1} parent=1 // pred_check
      _
    $region15: #{tpu_custom_call.1} parent=1 // pred_check_branch
      %36 = sbr.rel (0) target = $region17
    $region16: #{tpu_custom_call.1} parent=1 // pred_region
      %37 = dma.done [#allocation3], 256
    $region17: #{tpu_custom_call.1} parent=1 // pred_fallthru
      _
    // Predicated region
    $region18: #{tpu_custom_call.1} parent=1 // pred_check
      _
    $region19: #{tpu_custom_call.1} parent=1 // pred_check_branch
      %39 = sbr.rel (0) target = $region21
    $region20: #{tpu_custom_call.1} parent=1 // pred_region
      %40 = dma.done [#allocation6], 256
    $region21: #{tpu_custom_call.1} parent=1 // pred_fallthru
      _
    %v41 = vlaneseq
    %v42 = vand.u32 %v41, 127
    %v43 = vadd.s32 %v42, 128
    %v44 = vand.u32 %v42, 15
    %v45 = vand.u32 %v43, 15
    %v46 = vshra.s32 %v42, 4
    %v47 = vshra.s32 %v43, 4
    %v48 = vadd.s32 %v46, 4294967295
    %v49 = vadd.s32 %v47, 4294967295
    %v50 = vadd.s32 %v44, 4294967295
    %v51 = vadd.s32 %v45, 4294967295
    %vm52 = vcmp.ge.s32.totalorder %v48, 0
    %vm53 = vcmp.ge.s32.totalorder %v49, 0
    %vm54 = vcmp.lt.s32.totalorder %v48, 16
    %vm55 = vcmp.lt.s32.totalorder %v49, 16
    %vm56 = vmand %vm52, %vm54
    %vm57 = vmand %vm53, %vm55
    %vm58 = vcmp.ge.s32.totalorder %v50, 0
    %vm59 = vcmp.ge.s32.totalorder %v51, 0
    %vm60 = vmand %vm56, %vm58
    %vm61 = vmand %vm57, %vm59
    %vm62 = vcmp.lt.s32.totalorder %v50, 16
    %vm63 = vcmp.lt.s32.totalorder %v51, 16
    %vm64 = vmand %vm60, %vm62
    %vm65 = vmand %vm61, %vm63
    %vm66 = vcmp.ge.s32.totalorder %v44, 0
    %vm67 = vcmp.ge.s32.totalorder %v45, 0
    %vm68 = vmand %vm56, %vm66
    %vm69 = vmand %vm57, %vm67
    %vm70 = vcmp.lt.s32.totalorder %v44, 16
    %vm71 = vcmp.lt.s32.totalorder %v45, 16
    %vm72 = vmand %vm68, %vm70
    %vm73 = vmand %vm69, %vm71
    %v74 = vadd.s32 %v44, 1
    %v75 = vadd.s32 %v45, 1
    %vm76 = vcmp.ge.s32.totalorder %v74, 0
    %vm77 = vcmp.ge.s32.totalorder %v75, 0
    %vm78 = vmand %vm56, %vm76
    %vm79 = vmand %vm57, %vm77
    %vm80 = vcmp.lt.s32.totalorder %v74, 16
    %vm81 = vcmp.lt.s32.totalorder %v75, 16
    %vm82 = vmand %vm78, %vm80
    %vm83 = vmand %vm79, %vm81
    %vm84 = vcmp.ge.s32.totalorder %v46, 0
    %vm85 = vcmp.ge.s32.totalorder %v47, 0
    %vm86 = vcmp.lt.s32.totalorder %v46, 16
    %vm87 = vcmp.lt.s32.totalorder %v47, 16
    %vm88 = vmand %vm84, %vm86
    %vm89 = vmand %vm85, %vm87
    %vm90 = vmand %vm88, %vm58
    %vm91 = vmand %vm89, %vm59
    %vm92 = vmand %vm90, %vm62
    %vm93 = vmand %vm91, %vm63
    %vm94 = vmand %vm88, %vm76
    %vm95 = vmand %vm89, %vm77
    %vm96 = vmand %vm94, %vm80
    %vm97 = vmand %vm95, %vm81
    %v98 = vadd.s32 %v46, 1
    %v99 = vadd.s32 %v47, 1
    %vm100 = vcmp.ge.s32.totalorder %v98, 0
    %vm101 = vcmp.ge.s32.totalorder %v99, 0
    %vm102 = vcmp.lt.s32.totalorder %v98, 16
    %vm103 = vcmp.lt.s32.totalorder %v99, 16
    %vm104 = vmand %vm100, %vm102
    %vm105 = vmand %vm101, %vm103
    %vm106 = vmand %vm104, %vm58
    %vm107 = vmand %vm105, %vm59
    %vm108 = vmand %vm106, %vm62
    %vm109 = vmand %vm107, %vm63
    %vm110 = vmand %vm104, %vm66
    %vm111 = vmand %vm105, %vm67
    %vm112 = vmand %vm110, %vm70
    %vm113 = vmand %vm111, %vm71
    %vm114 = vmand %vm104, %vm76
    %vm115 = vmand %vm105, %vm77
    %vm116 = vmand %vm114, %vm80
    %vm117 = vmand %vm115, %vm81
    %v118 = vld [vmem:[#allocation5] sm:$0xff]
    %s119 = scalar_lea.vmem [#allocation5], 8
    %v120 = vld [vmem:[%s119] sm:$0xff]
    %v121 = vld [vmem:[%s2] sm:$0xff]
    %v122 = vld [vmem:[#allocation2] sm:$0xff]
    %v123 = vld [vmem:[#allocation2 + $0x8] sm:$0xff]
    %124 = vrot.lane.b32.xlu0 %v122, 17
    %v125 = vpop.permute.xlu0 %124
    %126 = vrot.lane.b32.xlu0 %v123, 17
    %v127 = vpop.permute.xlu0 %126
    %vm128 = vcmp.lt.s32.totalorder %v42, 17
    %v129 = vsel %vm128, %v125, %v127
    %v130 = vsel %vm128, %v127, %v125
    %v131 = vsel %vm64, 1, 0
    %v132 = vsel %vm65, 1, 0
    %vm133 = vcmp.eq.s32.totalorder %v131, 1
    %vm134 = vcmp.eq.s32.totalorder %v132, 1
    %v135 = vsel %vm133, %v130, 0.0
    %v136 = vsel %vm134, %v129, 0.0
    %137 = vrot.lane.b32.xlu0 %v122, 16
    %v138 = vpop.permute.xlu0 %137
    %139 = vrot.lane.b32.xlu0 %v123, 16
    %v140 = vpop.permute.xlu0 %139
    %vm141 = vcmp.lt.s32.totalorder %v42, 16
    %v142 = vsel %vm141, %v138, %v140
    %v143 = vsel %vm141, %v140, %v138
    %v144 = vsel %vm72, 1, 0
    %v145 = vsel %vm73, 1, 0
    %vm146 = vcmp.eq.s32.totalorder %v144, 1
    %vm147 = vcmp.eq.s32.totalorder %v145, 1
    %v148 = vsel %vm146, %v143, 0.0
    %v149 = vsel %vm147, %v142, 0.0
    %150 = vrot.lane.b32.xlu0 %v122, 15
    %v151 = vpop.permute.xlu0 %150
    %152 = vrot.lane.b32.xlu0 %v123, 15
    %v153 = vpop.permute.xlu0 %152
    %vm154 = vcmp.lt.s32.totalorder %v42, 15
    %v155 = vsel %vm154, %v151, %v153
    %v156 = vsel %vm154, %v153, %v151
    %v157 = vsel %vm82, 1, 0
    %v158 = vsel %vm83, 1, 0
    %vm159 = vcmp.eq.s32.totalorder %v157, 1
    %vm160 = vcmp.eq.s32.totalorder %v158, 1
    %v161 = vsel %vm159, %v156, 0.0
    %v162 = vsel %vm160, %v155, 0.0
    %163 = vrot.lane.b32.xlu0 %v122, 1
    %v164 = vpop.permute.xlu0 %163
    %165 = vrot.lane.b32.xlu0 %v123, 1
    %v166 = vpop.permute.xlu0 %165
    %vm167 = vcmp.lt.s32.totalorder %v42, 1
    %v168 = vsel %vm167, %v164, %v166
    %v169 = vsel %vm167, %v166, %v164
    %v170 = vsel %vm92, 1, 0
    %v171 = vsel %vm93, 1, 0
    %vm172 = vcmp.eq.s32.totalorder %v170, 1
    %vm173 = vcmp.eq.s32.totalorder %v171, 1
    %v174 = vsel %vm172, %v169, 0.0
    %v175 = vsel %vm173, %v168, 0.0
    %176 = vrot.lane.b32.xlu0 %v122, 127
    %v177 = vpop.permute.xlu0 %176
    %178 = vrot.lane.b32.xlu0 %v123, 127
    %v179 = vpop.permute.xlu0 %178
    %vm180 = vcmp.lt.s32.totalorder %v42, 127
    %v181 = vsel %vm180, %v177, %v179
    %v182 = vsel %vm180, %v179, %v177
    %v183 = vsel %vm96, 1, 0
    %v184 = vsel %vm97, 1, 0
    %vm185 = vcmp.eq.s32.totalorder %v183, 1
    %vm186 = vcmp.eq.s32.totalorder %v184, 1
    %v187 = vsel %vm185, %v181, 0.0
    %v188 = vsel %vm186, %v182, 0.0
    %189 = vrot.lane.b32.xlu0 %v122, 113
    %v190 = vpop.permute.xlu0 %189
    %191 = vrot.lane.b32.xlu0 %v123, 113
    %v192 = vpop.permute.xlu0 %191
    %vm193 = vcmp.lt.s32.totalorder %v42, 113
    %v194 = vsel %vm193, %v190, %v192
    %v195 = vsel %vm193, %v192, %v190
    %v196 = vsel %vm108, 1, 0
    %v197 = vsel %vm109, 1, 0
    %vm198 = vcmp.eq.s32.totalorder %v196, 1
    %vm199 = vcmp.eq.s32.totalorder %v197, 1
    %v200 = vsel %vm198, %v194, 0.0
    %v201 = vsel %vm199, %v195, 0.0
    %202 = vrot.lane.b32.xlu0 %v122, 112
    %v203 = vpop.permute.xlu0 %202
    %204 = vrot.lane.b32.xlu0 %v123, 112
    %v205 = vpop.permute.xlu0 %204
    %vm206 = vcmp.lt.s32.totalorder %v42, 112
    %v207 = vsel %vm206, %v203, %v205
    %v208 = vsel %vm206, %v205, %v203
    %v209 = vsel %vm112, 1, 0
    %v210 = vsel %vm113, 1, 0
    %vm211 = vcmp.eq.s32.totalorder %v209, 1
    %vm212 = vcmp.eq.s32.totalorder %v210, 1
    %v213 = vsel %vm211, %v207, 0.0
    %v214 = vsel %vm212, %v208, 0.0
    %215 = vrot.lane.b32.xlu0 %v122, 111
    %v216 = vpop.permute.xlu0 %215
    %217 = vrot.lane.b32.xlu0 %v123, 111
    %v218 = vpop.permute.xlu0 %217
    %vm219 = vcmp.lt.s32.totalorder %v42, 111
    %v220 = vsel %vm219, %v216, %v218
    %v221 = vsel %vm219, %v218, %v216
    %v222 = vsel %vm116, 1, 0
    %v223 = vsel %vm117, 1, 0
    %vm224 = vcmp.eq.s32.totalorder %v222, 1
    %vm225 = vcmp.eq.s32.totalorder %v223, 1
    %v226 = vsel %vm224, %v220, 0.0
    %v227 = vsel %vm225, %v221, 0.0
    %vm228 = vcmask 588800
    %v230 = vsel %vm228, %v118, 0
    %232 = vmatprep.subr.mxu0 %v136
    %233 = vmatpush1.msra.mxu0 %v135
    %234 = vmatprep.subr.mxu0 %v149
    %235 = vmatpush1.msra.mxu0 %v148
    %236 = vmatprep.subr.mxu0 %v162
    %237 = vmatpush1.msra.mxu0 %v161
    %238 = vmatprep.subr.mxu0 %v175
    %239 = vmatpush1.msra.mxu0 %v174
    %240 = vmatprep.subr.mxu0 %v123
    %241 = vmatpush1.msra.mxu0 %v122
    %242 = vmatprep.subr.mxu0 %v188
    %243 = vmatpush1.msra.mxu0 %v187
    %244 = vmatprep.subr.mxu0 %v201
    %245 = vmatpush1.msra.mxu0 %v200
    %246 = vmatprep.subr.mxu0 %v214
    %247 = vmatpush1.msra.mxu0 %v213
    %248 = vmatprep.subr.mxu0 %v227
    %249 = vmatpush1.msra.mxu0 %v226
    %250 = vmatprep.subr.mxu0 0.0
    %251 = vmatpush1.msra.mxu0 0.0
    %252 = vmatprep.subr.mxu0 0.0
    %253 = vmatpush1.msra.mxu0 0.0
    %254 = vmatprep.subr.mxu0 0.0
    %255 = vmatpush1.msra.mxu0 0.0
    %256 = vmatprep.subr.mxu0 0.0
    %257 = vmatpush1.msra.mxu0 0.0
    %258 = vmatprep.subr.mxu0 0.0
    %259 = vmatpush1.msra.mxu0 0.0
    %260 = vmatprep.subr.mxu0 0.0
    %261 = vmatpush1.msra.mxu0 0.0
    %262 = vmatprep.subr.mxu0 0.0
    %263 = vmatpush1.msra.mxu0 0.0
    %264 = vmatprep.subr.mxu0 0.0
    %265 = vmatpush1.msra.mxu0 0.0
    %266 = vmatprep.subr.mxu0 0.0
    %267 = vmatpush1.msra.mxu0 0.0
    %268 = vmatprep.subr.mxu0 0.0
    %269 = vmatpush1.msra.mxu0 0.0
    %270 = vmatprep.subr.mxu0 0.0
    %271 = vmatpush1.msra.mxu0 0.0
    %272 = vmatprep.subr.mxu0 0.0
    %273 = vmatpush1.msra.mxu0 0.0
    %274 = vmatprep.subr.mxu0 0.0
    %275 = vmatpush1.msra.mxu0 0.0
    %276 = vmatprep.subr.mxu0 0.0
    %277 = vmatpush1.msra.mxu0 0.0
    %278 = vmatprep.subr.mxu0 0.0
    %279 = vmatpush1.msra.mxu0 0.0
    %280 = vmatprep.subr.mxu0 0.0
    %281 = vmatpush1.msra.mxu0 0.0
    %282 = vmatprep.subr.mxu0 0.0
    %283 = vmatpush1.msra.mxu0 0.0
    %284 = vmatprep.subr.mxu0 0.0
    %285 = vmatpush1.msra.mxu0 0.0
    %286 = vmatprep.subr.mxu0 0.0
    %287 = vmatpush1.msra.mxu0 0.0
    %288 = vmatprep.subr.mxu0 0.0
    %289 = vmatpush1.msra.mxu0 0.0
    %290 = vmatprep.subr.mxu0 0.0
    %291 = vmatpush1.msra.mxu0 0.0
    %292 = vmatprep.subr.mxu0 0.0
    %293 = vmatpush1.msra.mxu0 0.0
    %294 = vmatprep.subr.mxu0 0.0
    %295 = vmatpush1.msra.mxu0 0.0
    %296 = vmatprep.mubr.f32.mxu0 0.0
    %297 = vmatmul.mubr.f32.gmra.mrb[0].mxu0 %v230
    %v298 = vpop.f32.mrb[0].mxu0
    %v299 = vadd.f32 0.0, %v298
    %v300 = vpop.f32.mrb[0].mxu0
    %v301 = vadd.f32 0.0, %v300
    %302 = vdwg.mxu0
    %304 = vset.pattern.permute.xlu0 0
    %305 = vperm.xlu0 %304, %v121
    %v306 = vpop.permute.xlu0 %305
    %v308 = vmul.f32 %v299, %v306
    %v309 = vmul.f32 %v301, %v306
    %310 = vset.pattern.permute.xlu0 1
    %311 = vperm.xlu0 %310, %v121
    %v312 = vpop.permute.xlu0 %311
    %v314 = vadd.f32 %v308, %v312
    %v315 = vadd.f32 %v309, %v312
    %v316 = vmax.f32 %v314, 0.0
    %v317 = vmax.f32 %v315, 0.0
    %318 = vrot.lane.b32.xlu0 %v316, 17
    %v319 = vpop.permute.xlu0 %318
    %320 = vrot.lane.b32.xlu0 %v317, 17
    %v321 = vpop.permute.xlu0 %320
    %v322 = vsel %vm128, %v319, %v321
    %v323 = vsel %vm128, %v321, %v319
    %v324 = vsel %vm133, %v323, 0.0
    %v325 = vsel %vm134, %v322, 0.0
    %326 = vrot.lane.b32.xlu0 %v316, 16
    %v327 = vpop.permute.xlu0 %326
    %328 = vrot.lane.b32.xlu0 %v317, 16
    %v329 = vpop.permute.xlu0 %328
    %v330 = vsel %vm141, %v327, %v329
    %v331 = vsel %vm141, %v329, %v327
    %v332 = vsel %vm146, %v331, 0.0
    %v333 = vsel %vm147, %v330, 0.0
    %334 = vrot.lane.b32.xlu0 %v316, 15
    %v335 = vpop.permute.xlu0 %334
    %336 = vrot.lane.b32.xlu0 %v317, 15
    %v337 = vpop.permute.xlu0 %336
    %v338 = vsel %vm154, %v335, %v337
    %v339 = vsel %vm154, %v337, %v335
    %v340 = vsel %vm159, %v339, 0.0
    %v341 = vsel %vm160, %v338, 0.0
    %342 = vrot.lane.b32.xlu0 %v316, 1
    %v343 = vpop.permute.xlu0 %342
    %344 = vrot.lane.b32.xlu0 %v317, 1
    %v345 = vpop.permute.xlu0 %344
    %v346 = vsel %vm167, %v343, %v345
    %v347 = vsel %vm167, %v345, %v343
    %v348 = vsel %vm172, %v347, 0.0
    %v349 = vsel %vm173, %v346, 0.0
    %350 = vrot.lane.b32.xlu0 %v316, 127
    %v351 = vpop.permute.xlu0 %350
    %352 = vrot.lane.b32.xlu0 %v317, 127
    %v353 = vpop.permute.xlu0 %352
    %v354 = vsel %vm180, %v351, %v353
    %v355 = vsel %vm180, %v353, %v351
    %v356 = vsel %vm185, %v354, 0.0
    %v357 = vsel %vm186, %v355, 0.0
    %358 = vrot.lane.b32.xlu0 %v316, 113
    %v359 = vpop.permute.xlu0 %358
    %360 = vrot.lane.b32.xlu0 %v317, 113
    %v361 = vpop.permute.xlu0 %360
    %v362 = vsel %vm193, %v359, %v361
    %v363 = vsel %vm193, %v361, %v359
    %v364 = vsel %vm198, %v362, 0.0
    %v365 = vsel %vm199, %v363, 0.0
    %366 = vrot.lane.b32.xlu0 %v316, 112
    %v367 = vpop.permute.xlu0 %366
    %368 = vrot.lane.b32.xlu0 %v317, 112
    %v369 = vpop.permute.xlu0 %368
    %v370 = vsel %vm206, %v367, %v369
    %v371 = vsel %vm206, %v369, %v367
    %v372 = vsel %vm211, %v370, 0.0
    %v373 = vsel %vm212, %v371, 0.0
    %374 = vrot.lane.b32.xlu0 %v316, 111
    %v375 = vpop.permute.xlu0 %374
    %376 = vrot.lane.b32.xlu0 %v317, 111
    %v377 = vpop.permute.xlu0 %376
    %v378 = vsel %vm219, %v375, %v377
    %v379 = vsel %vm219, %v377, %v375
    %v380 = vsel %vm224, %v378, 0.0
    %v381 = vsel %vm225, %v379, 0.0
    %v383 = vsel %vm228, %v120, 0
    %385 = vmatprep.subr.mxu0 %v325
    %386 = vmatpush1.msra.mxu0 %v324
    %387 = vmatprep.subr.mxu0 %v333
    %388 = vmatpush1.msra.mxu0 %v332
    %389 = vmatprep.subr.mxu0 %v341
    %390 = vmatpush1.msra.mxu0 %v340
    %391 = vmatprep.subr.mxu0 %v349
    %392 = vmatpush1.msra.mxu0 %v348
    %393 = vmatprep.subr.mxu0 %v317
    %394 = vmatpush1.msra.mxu0 %v316
    %395 = vmatprep.subr.mxu0 %v357
    %396 = vmatpush1.msra.mxu0 %v356
    %397 = vmatprep.subr.mxu0 %v365
    %398 = vmatpush1.msra.mxu0 %v364
    %399 = vmatprep.subr.mxu0 %v373
    %400 = vmatpush1.msra.mxu0 %v372
    %401 = vmatprep.subr.mxu0 %v381
    %402 = vmatpush1.msra.mxu0 %v380
    %403 = vmatprep.subr.mxu0 0.0
    %404 = vmatpush1.msra.mxu0 0.0
    %405 = vmatprep.subr.mxu0 0.0
    %406 = vmatpush1.msra.mxu0 0.0
    %407 = vmatprep.subr.mxu0 0.0
    %408 = vmatpush1.msra.mxu0 0.0
    %409 = vmatprep.subr.mxu0 0.0
    %410 = vmatpush1.msra.mxu0 0.0
    %411 = vmatprep.subr.mxu0 0.0
    %412 = vmatpush1.msra.mxu0 0.0
    %413 = vmatprep.subr.mxu0 0.0
    %414 = vmatpush1.msra.mxu0 0.0
    %415 = vmatprep.subr.mxu0 0.0
    %416 = vmatpush1.msra.mxu0 0.0
    %417 = vmatprep.subr.mxu0 0.0
    %418 = vmatpush1.msra.mxu0 0.0
    %419 = vmatprep.subr.mxu0 0.0
    %420 = vmatpush1.msra.mxu0 0.0
    %421 = vmatprep.subr.mxu0 0.0
    %422 = vmatpush1.msra.mxu0 0.0
    %423 = vmatprep.subr.mxu0 0.0
    %424 = vmatpush1.msra.mxu0 0.0
    %425 = vmatprep.subr.mxu0 0.0
    %426 = vmatpush1.msra.mxu0 0.0
    %427 = vmatprep.subr.mxu0 0.0
    %428 = vmatpush1.msra.mxu0 0.0
    %429 = vmatprep.subr.mxu0 0.0
    %430 = vmatpush1.msra.mxu0 0.0
    %431 = vmatprep.subr.mxu0 0.0
    %432 = vmatpush1.msra.mxu0 0.0
    %433 = vmatprep.subr.mxu0 0.0
    %434 = vmatpush1.msra.mxu0 0.0
    %435 = vmatprep.subr.mxu0 0.0
    %436 = vmatpush1.msra.mxu0 0.0
    %437 = vmatprep.subr.mxu0 0.0
    %438 = vmatpush1.msra.mxu0 0.0
    %439 = vmatprep.subr.mxu0 0.0
    %440 = vmatpush1.msra.mxu0 0.0
    %441 = vmatprep.subr.mxu0 0.0
    %442 = vmatpush1.msra.mxu0 0.0
    %443 = vmatprep.subr.mxu0 0.0
    %444 = vmatpush1.msra.mxu0 0.0
    %445 = vmatprep.subr.mxu0 0.0
    %446 = vmatpush1.msra.mxu0 0.0
    %447 = vmatprep.subr.mxu0 0.0
    %448 = vmatpush1.msra.mxu0 0.0
    %449 = vmatprep.mubr.f32.mxu0 0.0
    %450 = vmatmul.mubr.f32.gmra.mrb[0].mxu0 %v383
    %v451 = vpop.f32.mrb[0].mxu0
    %v452 = vadd.f32 0.0, %v451
    %v453 = vpop.f32.mrb[0].mxu0
    %v454 = vadd.f32 0.0, %v453
    %455 = vdwg.mxu0
    %456 = vset.pattern.permute.xlu0 2
    %457 = vperm.xlu0 %456, %v121
    %v458 = vpop.permute.xlu0 %457
    %v460 = vmul.f32 %v452, %v458
    %v461 = vmul.f32 %v454, %v458
    %462 = vset.pattern.permute.xlu0 3
    %463 = vperm.xlu0 %462, %v121
    %v464 = vpop.permute.xlu0 %463
    %v466 = vadd.f32 %v460, %v464
    %v467 = vadd.f32 %v461, %v464
    %v468 = vadd.f32 %v466, %v122
    %v469 = vadd.f32 %v467, %v123
    %v470 = vmax.f32 %v468, 0.0
    %v471 = vmax.f32 %v469, 0.0
    %472 = vst [vmem:[#allocation7] sm:$0xff] %v470
    %473 = vst [vmem:[#allocation7 + $0x8] sm:$0xff] %v471
    // Predicated region
    $region22: #{tpu_custom_call.1} parent=1 // pred_check
      _
    $region23: #{tpu_custom_call.1} parent=1 // pred_check_branch
      %475 = sbr.rel (0) target = $region25
    $region24: #{tpu_custom_call.1} parent=1 // pred_region
      %s477 = ssub.s32 256, 256
      %478 = vsyncadd [#allocation4], %s477
      %s480 = sshll.u32 [#allocation7], 4
      %s481 = int_to_ptr.vmem [resolvable:$true] %s480
      %483 = dma.vmem_to_hbm [thread:$0]  %s481, 256, %s3, [#allocation4]
    $region25: #{tpu_custom_call.1} parent=1 // pred_fallthru
      _
    // Predicated region
    $region26: #{tpu_custom_call.1} parent=1 // pred_check
      _
    $region27: #{tpu_custom_call.1} parent=1 // pred_check_branch
      %485 = sbr.rel (0) target = $region29
    $region28: #{tpu_custom_call.1} parent=1 // pred_region
      %486 = dma.done [#allocation4], 256
    $region29: #{tpu_custom_call.1} parent=1 // pred_fallthru
      _
    %487 = vsyncpa [#allocation3], 1
    %488 = vsyncpa [#allocation6], 1
    %489 = vsyncpa [#allocation4], 1

</llo_original>
